<compile_context>
chip_gen: v5e
topology: v5e:2x2
jax: 0.10.0
libtpu: 0.0.40
codegen_flags: <defaults>
</compile_context>

<pallas_src>
import functools

import jax
import jax.numpy as jnp
import numpy as np
from jax import lax
from jax.experimental import pallas as pl
from jax.experimental.pallas import tpu as pltpu


# ----------------------------------------------------------------------------
# Pallas kernel: whole LSTM recurrence + output head in one invocation
# ----------------------------------------------------------------------------
def _make_lstm_kernel(T: int, N: int, H: int, base: bool):

    def kernel(xproj_ref, whh_ref, wout_ref, bout_ref, out_ref, hs_ref):
        # Loop-invariant loads hoisted out of the recurrence.
        whh = whh_ref[...]          # (H, 4H)

        def step(t, carry):
            h, c = carry
            # gates = (x_t @ W_ih^T + b)  [precomputed]  +  h @ W_hh^T
            gates = xproj_ref[t] + jnp.dot(
                h, whh, preferred_element_type=jnp.float32)        # (N, 4H)

            # PyTorch gate order: i, f, g, o
            i_g = jax.nn.sigmoid(gates[:, 0:H])
            f_g = jax.nn.sigmoid(gates[:, H:2 * H])
            g_g = jnp.tanh(gates[:, 2 * H:3 * H])
            o_g = jax.nn.sigmoid(gates[:, 3 * H:4 * H])

            c = f_g * c + i_g * g_g
            h = o_g * jnp.tanh(c)
            hs_ref[t] = h            # stash hidden state for the head
            return (h, c)

        h0 = jnp.zeros((N, H), jnp.float32)
        lax.fori_loop(0, T, step, (h0, h0), unroll=True)

        # Output head for all (t, n) at once: Linear(H -> 1) + activation,
        # single lane-dense store of the whole (T, N) result.
        hs = hs_ref[...]                                           # (T, N, H)
        y = jnp.sum(hs * wout_ref[...], axis=-1) + bout_ref[...]   # (T, N)
        out_ref[...] = jnp.tanh(y) if base else jax.nn.sigmoid(y)

    return kernel


def lstm_head_pallas(embeds, w_ih, w_hh, b_ih, b_hh, w_out, b_out, *,
                     hidden_dim: int, base: bool):
    """embeds: (T, N, F) float32.  Returns (T, N) float32."""
    T, N, F = embeds.shape
    H = hidden_dim
    f32 = jnp.float32

    # Hoisted input projection: one MXU-friendly (T*N, F) @ (F, 4H) matmul with
    # the combined bias folded in; only h @ W_hh^T stays inside the time loop.
    bias = (b_ih + b_hh).astype(f32)
    x_proj = (jnp.dot(embeds.reshape(T * N, F).astype(f32),
                      w_ih.T.astype(f32), preferred_element_type=f32)
              + bias[None, :]).reshape(T, N, 4 * H)

    whh_t = jnp.asarray(w_hh.T, f32)                  # (H, 4H)
    wout_b = jnp.asarray(w_out.reshape(1, 1, H), f32)  # (1, 1, H)
    bout = jnp.asarray(b_out.reshape(1, 1), f32)       # (1, 1)
    # TODO(synk): for v6e/v7x, whh_t could be cast to bf16 (f32 accumulation)
    # to cut MXU passes; kept f32 here to match the reference bit-for-bit-ish.

    kernel = _make_lstm_kernel(T, N, H, base)

    flops = T * (2 * N * H * 4 * H + 12 * N * H) + 2 * T * N * H
    transcendentals = T * 5 * N * H + T * N
    bytes_accessed = 4 * (T * N * 4 * H + H * 4 * H + H + 1 + T * N)

    out = pl.pallas_call(
        kernel,
        out_shape=jax.ShapeDtypeStruct((T, N), f32),
        grid_spec=pltpu.PrefetchScalarGridSpec(
            num_scalar_prefetch=0,
            grid=(1,),                       # single invocation; time loop is in-kernel
            in_specs=[
                pl.BlockSpec((T, N, 4 * H), lambda i: (0, 0, 0)),  # X@W_ih^T + b
                pl.BlockSpec((H, 4 * H), lambda i: (0, 0)),        # W_hh^T
                pl.BlockSpec((1, 1, H), lambda i: (0, 0, 0)),      # W_out row
                pl.BlockSpec((1, 1), lambda i: (0, 0)),            # b_out
            ],
            out_specs=pl.BlockSpec((T, N), lambda i: (0, 0)),
            scratch_shapes=[
                pltpu.VMEM((T, N, H), f32),   # all hidden states
            ],
        ),
        compiler_params=pltpu.CompilerParams(
            dimension_semantics=("arbitrary",)),
        cost_estimate=pl.CostEstimate(flops=flops,
                                      transcendentals=transcendentals,
                                      bytes_accessed=bytes_accessed),
    )(x_proj, whh_t, wout_b, bout)

    return out


# ----------------------------------------------------------------------------
# Full UserTemp.forward in JAX (glue) + Pallas hot path
# ----------------------------------------------------------------------------
def user_temp_forward(params, questions, timestamps, tags, *,
                      hidden_dim: int, base: bool):
    # timestamps: (B, S) -> (B, S, 1);  gaps[:, 1:] = diff along dim 1
    ts = timestamps[:, :, None].astype(jnp.float32)
    gaps = jnp.zeros_like(ts)
    gaps = gaps.at[:, 1:].set(ts[:, 1:] - ts[:, :-1])

    embed_qs = jnp.take(params["embed_q"], questions, axis=0)          # (B,S,E)
    embed_ts = jnp.take(params["embed_t"], tags, axis=0).sum(axis=2)   # (B,S,E)

    embeds = jnp.concatenate([embed_qs, embed_ts, gaps], axis=2)       # (B,S,2E+1)
    embeds = embeds.astype(jnp.float32)

    # nn.LSTM (batch_first=False) treats dim0 of `embeds` as time: feed as-is.
    out = lstm_head_pallas(
        embeds,
        params["w_ih"], params["w_hh"], params["b_ih"], params["b_hh"],
        params["w_out"], params["b_out"],
        hidden_dim=hidden_dim, base=base)
    return out  # (B, S)  == user_temp_contribution.squeeze() after activation


# ----------------------------------------------------------------------------
# Pure-JAX reference (for correctness check)
# ----------------------------------------------------------------------------
def user_temp_forward_ref(params, questions, timestamps, tags, *,
                          hidden_dim: int, base: bool):
    H = hidden_dim
    ts = timestamps[:, :, None].astype(jnp.float32)
    gaps = jnp.zeros_like(ts)
    gaps = gaps.at[:, 1:].set(ts[:, 1:] - ts[:, :-1])
    embed_qs = jnp.take(params["embed_q"], questions, axis=0)
    embed_ts = jnp.take(params["embed_t"], tags, axis=0).sum(axis=2)
    embeds = jnp.concatenate([embed_qs, embed_ts, gaps], axis=2).astype(jnp.float32)

    T, N, F = embeds.shape
    w_ih, w_hh = params["w_ih"], params["w_hh"]
    b = params["b_ih"] + params["b_hh"]

    def step(carry, x_t):
        h, c = carry
        gates = x_t @ w_ih.T + h @ w_hh.T + b
        i_g = jax.nn.sigmoid(gates[:, 0:H])
        f_g = jax.nn.sigmoid(gates[:, H:2 * H])
        g_g = jnp.tanh(gates[:, 2 * H:3 * H])
        o_g = jax.nn.sigmoid(gates[:, 3 * H:4 * H])
        c = f_g * c + i_g * g_g
        h = o_g * jnp.tanh(c)
        return (h, c), h

    h0 = jnp.zeros((N, H), jnp.float32)
    _, hs = lax.scan(step, (h0, h0), embeds)                 # (T, N, H)
    y = hs @ params["w_out"].T + params["b_out"]             # (T, N, 1)
    y = y[:, :, 0]
    return jnp.tanh(y) if base else jax.nn.sigmoid(y)


# ----------------------------------------------------------------------------
# Deterministic parameter init (matches shapes from UserTemp.__init__)
# ----------------------------------------------------------------------------
def init_params(key, embed_dim, hidden_dim, questionset_size, tagset_size):
    ks = jax.random.split(key, 8)
    F = embed_dim * 2 + 1
    scale = 0.1
    embed_q = scale * jax.random.normal(ks[0], (questionset_size + 1, embed_dim),
                                        jnp.float32)
    embed_t = scale * jax.random.normal(ks[1], (tagset_size + 1, embed_dim),
                                        jnp.float32)
    # padding_idx rows are zero in PyTorch embeddings
    embed_q = embed_q.at[questionset_size].set(0.0)
    embed_t = embed_t.at[tagset_size].set(0.0)
    return {
        "embed_q": embed_q,
        "embed_t": embed_t,
        "w_ih": scale * jax.random.normal(ks[2], (4 * hidden_dim, F), jnp.float32),
        "w_hh": scale * jax.random.normal(ks[3], (4 * hidden_dim, hidden_dim), jnp.float32),
        "b_ih": scale * jax.random.normal(ks[4], (4 * hidden_dim,), jnp.float32),
        "b_hh": scale * jax.random.normal(ks[5], (4 * hidden_dim,), jnp.float32),
        "w_out": scale * jax.random.normal(ks[6], (1, hidden_dim), jnp.float32),
        "b_out": scale * jax.random.normal(ks[7], (1,), jnp.float32),
    }


if __name__ == "__main__":
    embed_dim = 8
    hidden_dim = 32
    questionset_size = 50
    tagset_size = 20
    base = True  # tanh head (set False for sigmoid head)

    B, S, NTAGS = 4, 8, 3

    key = jax.random.PRNGKey(0)
    kq, kt, ktag, kp = jax.random.split(key, 4)

    questions = jax.random.randint(kq, (B, S), 0, questionset_size, jnp.int32)
    timestamps = jnp.cumsum(
        jax.random.uniform(kt, (B, S), jnp.float32, 0.0, 2.0), axis=1)
    tags = jax.random.randint(ktag, (B, S, NTAGS), 0, tagset_size, jnp.int32)

    params = init_params(kp, embed_dim, hidden_dim, questionset_size, tagset_size)

    fwd = functools.partial(user_temp_forward, hidden_dim=hidden_dim, base=base)
    out = jax.jit(fwd)(params, questions, timestamps, tags)
    out = jax.block_until_ready(out)

    ref = user_temp_forward_ref(params, questions, timestamps, tags,
                                hidden_dim=hidden_dim, base=base)
    np.testing.assert_allclose(np.asarray(out), np.asarray(ref),
                               rtol=2e-5, atol=2e-5)

    assert out.shape == (B, S)
    print("KERNEL_OK")
</pallas_src>

<mosaic_0001>
module attributes {stable_mosaic.version = 11 : i64} {
  func.func @kernel(%arg0: i32, %arg1: memref<4x8x128xf32, #tpu.memory_space<vmem>>, %arg2: memref<32x128xf32, #tpu.memory_space<vmem>>, %arg3: memref<1x1x32xf32, #tpu.memory_space<vmem>>, %arg4: memref<1x1xf32, #tpu.memory_space<vmem>>, %arg5: memref<4x8xf32, #tpu.memory_space<vmem>>, %arg6: memref<4x8x32xf32, #tpu.memory_space<vmem>>) attributes {dimension_semantics = [#tpu.dimension_semantics<arbitrary>], iteration_bounds = array<i64: 1>, scalar_prefetch = 0 : i64, scratch_operands = 1 : i64, tpu.core_type = #tpu.core_type<tc>, window_params = [{pipeline_mode = #tpu.pipeline_mode<synchronous>, transform_indices = @transform_0, window_bounds = array<i64: 4, 8, 128>}, {pipeline_mode = #tpu.pipeline_mode<synchronous>, transform_indices = @transform_1, window_bounds = array<i64: 32, 128>}, {pipeline_mode = #tpu.pipeline_mode<synchronous>, transform_indices = @transform_2, window_bounds = array<i64: 1, 1, 32>}, {pipeline_mode = #tpu.pipeline_mode<synchronous>, transform_indices = @transform_3, window_bounds = array<i64: 1, 1>}, {pipeline_mode = #tpu.pipeline_mode<synchronous>, transform_indices = @transform_4, window_bounds = array<i64: 4, 8>}]} {
    %c0 = arith.constant 0 : index
    %c0_0 = arith.constant 0 : index
    %0 = vector.load %arg2[%c0, %c0_0] : memref<32x128xf32, #tpu.memory_space<vmem>>, vector<32x128xf32>
    %cst = arith.constant 0.000000e+00 : f32
    %1 = vector.broadcast %cst : f32 to vector<8x32xf32>
    %c0_i32 = arith.constant 0 : i32
    %2 = arith.index_cast %c0_i32 : i32 to index
    %c0_1 = arith.constant 0 : index
    %c0_2 = arith.constant 0 : index
    %3 = vector.load %arg1[%2, %c0_1, %c0_2] : memref<4x8x128xf32, #tpu.memory_space<vmem>>, vector<1x8x128xf32>
    %4 = vector.shape_cast %3 : vector<1x8x128xf32> to vector<8x128xf32>
    %cst_3 = arith.constant dense<0.000000e+00> : vector<8x128xf32>
    %5 = tpu.matmul %1, %0, %cst_3 {dimension_numbers = #tpu.dot_dimension_numbers<[1], [0], [0], [1], [0, 0, 1, 1], [], []>} : vector<8x32xf32>, vector<32x128xf32>, vector<8x128xf32> -> vector<8x128xf32>
    %6 = arith.addf %4, %5 : vector<8x128xf32>
    %7 = vector.extract_strided_slice %6 {offsets = [0, 0], sizes = [8, 32], strides = [1, 1]} : vector<8x128xf32> to vector<8x32xf32>
    %8 = arith.negf %7 : vector<8x32xf32>
    %9 = math.exp %8 : vector<8x32xf32>
    %cst_4 = arith.constant 1.000000e+00 : f32
    %10 = vector.broadcast %cst_4 : f32 to vector<8x32xf32>
    %11 = arith.addf %10, %9 : vector<8x32xf32>
    %12 = arith.divf %10, %11 : vector<8x32xf32>
    %13 = vector.extract_strided_slice %6 {offsets = [0, 32], sizes = [8, 32], strides = [1, 1]} : vector<8x128xf32> to vector<8x32xf32>
    %14 = arith.negf %13 : vector<8x32xf32>
    %15 = math.exp %14 : vector<8x32xf32>
    %cst_5 = arith.constant 1.000000e+00 : f32
    %16 = vector.broadcast %cst_5 : f32 to vector<8x32xf32>
    %17 = arith.addf %16, %15 : vector<8x32xf32>
    %18 = arith.divf %16, %17 : vector<8x32xf32>
    %19 = vector.extract_strided_slice %6 {offsets = [0, 64], sizes = [8, 32], strides = [1, 1]} : vector<8x128xf32> to vector<8x32xf32>
    %20 = math.tanh %19 : vector<8x32xf32>
    %21 = vector.extract_strided_slice %6 {offsets = [0, 96], sizes = [8, 32], strides = [1, 1]} : vector<8x128xf32> to vector<8x32xf32>
    %22 = arith.negf %21 : vector<8x32xf32>
    %23 = math.exp %22 : vector<8x32xf32>
    %cst_6 = arith.constant 1.000000e+00 : f32
    %24 = vector.broadcast %cst_6 : f32 to vector<8x32xf32>
    %25 = arith.addf %24, %23 : vector<8x32xf32>
    %26 = arith.divf %24, %25 : vector<8x32xf32>
    %27 = arith.mulf %18, %1 : vector<8x32xf32>
    %28 = arith.mulf %12, %20 : vector<8x32xf32>
    %29 = arith.addf %27, %28 : vector<8x32xf32>
    %30 = math.tanh %29 : vector<8x32xf32>
    %31 = arith.mulf %26, %30 : vector<8x32xf32>
    %32 = arith.index_cast %c0_i32 : i32 to index
    %c0_7 = arith.constant 0 : index
    %c0_8 = arith.constant 0 : index
    %33 = vector.load %arg6[%32, %c0_7, %c0_8] : memref<4x8x32xf32, #tpu.memory_space<vmem>>, vector<1x8x32xf32>
    %34 = vector.shape_cast %33 : vector<1x8x32xf32> to vector<8x32xf32>
    %35 = vector.shape_cast %31 : vector<8x32xf32> to vector<1x8x32xf32>
    tpu.vector_store %arg6[%32, %c0_7, %c0_8], %35 {strides = array<i32>} : memref<4x8x32xf32, #tpu.memory_space<vmem>>, vector<1x8x32xf32>,
    %c1_i32 = arith.constant 1 : i32
    %36 = arith.index_cast %c1_i32 : i32 to index
    %c0_9 = arith.constant 0 : index
    %c0_10 = arith.constant 0 : index
    %37 = vector.load %arg1[%36, %c0_9, %c0_10] : memref<4x8x128xf32, #tpu.memory_space<vmem>>, vector<1x8x128xf32>
    %38 = vector.shape_cast %37 : vector<1x8x128xf32> to vector<8x128xf32>
    %cst_11 = arith.constant dense<0.000000e+00> : vector<8x128xf32>
    %39 = tpu.matmul %31, %0, %cst_11 {dimension_numbers = #tpu.dot_dimension_numbers<[1], [0], [0], [1], [0, 0, 1, 1], [], []>} : vector<8x32xf32>, vector<32x128xf32>, vector<8x128xf32> -> vector<8x128xf32>
    %40 = arith.addf %38, %39 : vector<8x128xf32>
    %41 = vector.extract_strided_slice %40 {offsets = [0, 0], sizes = [8, 32], strides = [1, 1]} : vector<8x128xf32> to vector<8x32xf32>
    %42 = arith.negf %41 : vector<8x32xf32>
    %43 = math.exp %42 : vector<8x32xf32>
    %cst_12 = arith.constant 1.000000e+00 : f32
    %44 = vector.broadcast %cst_12 : f32 to vector<8x32xf32>
    %45 = arith.addf %44, %43 : vector<8x32xf32>
    %46 = arith.divf %44, %45 : vector<8x32xf32>
    %47 = vector.extract_strided_slice %40 {offsets = [0, 32], sizes = [8, 32], strides = [1, 1]} : vector<8x128xf32> to vector<8x32xf32>
    %48 = arith.negf %47 : vector<8x32xf32>
    %49 = math.exp %48 : vector<8x32xf32>
    %cst_13 = arith.constant 1.000000e+00 : f32
    %50 = vector.broadcast %cst_13 : f32 to vector<8x32xf32>
    %51 = arith.addf %50, %49 : vector<8x32xf32>
    %52 = arith.divf %50, %51 : vector<8x32xf32>
    %53 = vector.extract_strided_slice %40 {offsets = [0, 64], sizes = [8, 32], strides = [1, 1]} : vector<8x128xf32> to vector<8x32xf32>
    %54 = math.tanh %53 : vector<8x32xf32>
    %55 = vector.extract_strided_slice %40 {offsets = [0, 96], sizes = [8, 32], strides = [1, 1]} : vector<8x128xf32> to vector<8x32xf32>
    %56 = arith.negf %55 : vector<8x32xf32>
    %57 = math.exp %56 : vector<8x32xf32>
    %cst_14 = arith.constant 1.000000e+00 : f32
    %58 = vector.broadcast %cst_14 : f32 to vector<8x32xf32>
    %59 = arith.addf %58, %57 : vector<8x32xf32>
    %60 = arith.divf %58, %59 : vector<8x32xf32>
    %61 = arith.mulf %52, %29 : vector<8x32xf32>
    %62 = arith.mulf %46, %54 : vector<8x32xf32>
    %63 = arith.addf %61, %62 : vector<8x32xf32>
    %64 = math.tanh %63 : vector<8x32xf32>
    %65 = arith.mulf %60, %64 : vector<8x32xf32>
    %66 = arith.index_cast %c1_i32 : i32 to index
    %c0_15 = arith.constant 0 : index
    %c0_16 = arith.constant 0 : index
    %67 = vector.load %arg6[%66, %c0_15, %c0_16] : memref<4x8x32xf32, #tpu.memory_space<vmem>>, vector<1x8x32xf32>
    %68 = vector.shape_cast %67 : vector<1x8x32xf32> to vector<8x32xf32>
    %69 = vector.shape_cast %65 : vector<8x32xf32> to vector<1x8x32xf32>
    tpu.vector_store %arg6[%66, %c0_15, %c0_16], %69 {strides = array<i32>} : memref<4x8x32xf32, #tpu.memory_space<vmem>>, vector<1x8x32xf32>,
    %c2_i32 = arith.constant 2 : i32
    %70 = arith.index_cast %c2_i32 : i32 to index
    %c0_17 = arith.constant 0 : index
    %c0_18 = arith.constant 0 : index
    %71 = vector.load %arg1[%70, %c0_17, %c0_18] : memref<4x8x128xf32, #tpu.memory_space<vmem>>, vector<1x8x128xf32>
    %72 = vector.shape_cast %71 : vector<1x8x128xf32> to vector<8x128xf32>
    %cst_19 = arith.constant dense<0.000000e+00> : vector<8x128xf32>
    %73 = tpu.matmul %65, %0, %cst_19 {dimension_numbers = #tpu.dot_dimension_numbers<[1], [0], [0], [1], [0, 0, 1, 1], [], []>} : vector<8x32xf32>, vector<32x128xf32>, vector<8x128xf32> -> vector<8x128xf32>
    %74 = arith.addf %72, %73 : vector<8x128xf32>
    %75 = vector.extract_strided_slice %74 {offsets = [0, 0], sizes = [8, 32], strides = [1, 1]} : vector<8x128xf32> to vector<8x32xf32>
    %76 = arith.negf %75 : vector<8x32xf32>
    %77 = math.exp %76 : vector<8x32xf32>
    %cst_20 = arith.constant 1.000000e+00 : f32
    %78 = vector.broadcast %cst_20 : f32 to vector<8x32xf32>
    %79 = arith.addf %78, %77 : vector<8x32xf32>
    %80 = arith.divf %78, %79 : vector<8x32xf32>
    %81 = vector.extract_strided_slice %74 {offsets = [0, 32], sizes = [8, 32], strides = [1, 1]} : vector<8x128xf32> to vector<8x32xf32>
    %82 = arith.negf %81 : vector<8x32xf32>
    %83 = math.exp %82 : vector<8x32xf32>
    %cst_21 = arith.constant 1.000000e+00 : f32
    %84 = vector.broadcast %cst_21 : f32 to vector<8x32xf32>
    %85 = arith.addf %84, %83 : vector<8x32xf32>
    %86 = arith.divf %84, %85 : vector<8x32xf32>
    %87 = vector.extract_strided_slice %74 {offsets = [0, 64], sizes = [8, 32], strides = [1, 1]} : vector<8x128xf32> to vector<8x32xf32>
    %88 = math.tanh %87 : vector<8x32xf32>
    %89 = vector.extract_strided_slice %74 {offsets = [0, 96], sizes = [8, 32], strides = [1, 1]} : vector<8x128xf32> to vector<8x32xf32>
    %90 = arith.negf %89 : vector<8x32xf32>
    %91 = math.exp %90 : vector<8x32xf32>
    %cst_22 = arith.constant 1.000000e+00 : f32
    %92 = vector.broadcast %cst_22 : f32 to vector<8x32xf32>
    %93 = arith.addf %92, %91 : vector<8x32xf32>
    %94 = arith.divf %92, %93 : vector<8x32xf32>
    %95 = arith.mulf %86, %63 : vector<8x32xf32>
    %96 = arith.mulf %80, %88 : vector<8x32xf32>
    %97 = arith.addf %95, %96 : vector<8x32xf32>
    %98 = math.tanh %97 : vector<8x32xf32>
    %99 = arith.mulf %94, %98 : vector<8x32xf32>
    %100 = arith.index_cast %c2_i32 : i32 to index
    %c0_23 = arith.constant 0 : index
    %c0_24 = arith.constant 0 : index
    %101 = vector.load %arg6[%100, %c0_23, %c0_24] : memref<4x8x32xf32, #tpu.memory_space<vmem>>, vector<1x8x32xf32>
    %102 = vector.shape_cast %101 : vector<1x8x32xf32> to vector<8x32xf32>
    %103 = vector.shape_cast %99 : vector<8x32xf32> to vector<1x8x32xf32>
    tpu.vector_store %arg6[%100, %c0_23, %c0_24], %103 {strides = array<i32>} : memref<4x8x32xf32, #tpu.memory_space<vmem>>, vector<1x8x32xf32>,
    %c3_i32 = arith.constant 3 : i32
    %104 = arith.index_cast %c3_i32 : i32 to index
    %c0_25 = arith.constant 0 : index
    %c0_26 = arith.constant 0 : index
    %105 = vector.load %arg1[%104, %c0_25, %c0_26] : memref<4x8x128xf32, #tpu.memory_space<vmem>>, vector<1x8x128xf32>
    %106 = vector.shape_cast %105 : vector<1x8x128xf32> to vector<8x128xf32>
    %cst_27 = arith.constant dense<0.000000e+00> : vector<8x128xf32>
    %107 = tpu.matmul %99, %0, %cst_27 {dimension_numbers = #tpu.dot_dimension_numbers<[1], [0], [0], [1], [0, 0, 1, 1], [], []>} : vector<8x32xf32>, vector<32x128xf32>, vector<8x128xf32> -> vector<8x128xf32>
    %108 = arith.addf %106, %107 : vector<8x128xf32>
    %109 = vector.extract_strided_slice %108 {offsets = [0, 0], sizes = [8, 32], strides = [1, 1]} : vector<8x128xf32> to vector<8x32xf32>
    %110 = arith.negf %109 : vector<8x32xf32>
    %111 = math.exp %110 : vector<8x32xf32>
    %cst_28 = arith.constant 1.000000e+00 : f32
    %112 = vector.broadcast %cst_28 : f32 to vector<8x32xf32>
    %113 = arith.addf %112, %111 : vector<8x32xf32>
    %114 = arith.divf %112, %113 : vector<8x32xf32>
    %115 = vector.extract_strided_slice %108 {offsets = [0, 32], sizes = [8, 32], strides = [1, 1]} : vector<8x128xf32> to vector<8x32xf32>
    %116 = arith.negf %115 : vector<8x32xf32>
    %117 = math.exp %116 : vector<8x32xf32>
    %cst_29 = arith.constant 1.000000e+00 : f32
    %118 = vector.broadcast %cst_29 : f32 to vector<8x32xf32>
    %119 = arith.addf %118, %117 : vector<8x32xf32>
    %120 = arith.divf %118, %119 : vector<8x32xf32>
    %121 = vector.extract_strided_slice %108 {offsets = [0, 64], sizes = [8, 32], strides = [1, 1]} : vector<8x128xf32> to vector<8x32xf32>
    %122 = math.tanh %121 : vector<8x32xf32>
    %123 = vector.extract_strided_slice %108 {offsets = [0, 96], sizes = [8, 32], strides = [1, 1]} : vector<8x128xf32> to vector<8x32xf32>
    %124 = arith.negf %123 : vector<8x32xf32>
    %125 = math.exp %124 : vector<8x32xf32>
    %cst_30 = arith.constant 1.000000e+00 : f32
    %126 = vector.broadcast %cst_30 : f32 to vector<8x32xf32>
    %127 = arith.addf %126, %125 : vector<8x32xf32>
    %128 = arith.divf %126, %127 : vector<8x32xf32>
    %129 = arith.mulf %120, %97 : vector<8x32xf32>
    %130 = arith.mulf %114, %122 : vector<8x32xf32>
    %131 = arith.addf %129, %130 : vector<8x32xf32>
    %132 = math.tanh %131 : vector<8x32xf32>
    %133 = arith.mulf %128, %132 : vector<8x32xf32>
    %134 = arith.index_cast %c3_i32 : i32 to index
    %c0_31 = arith.constant 0 : index
    %c0_32 = arith.constant 0 : index
    %135 = vector.load %arg6[%134, %c0_31, %c0_32] : memref<4x8x32xf32, #tpu.memory_space<vmem>>, vector<1x8x32xf32>
    %136 = vector.shape_cast %135 : vector<1x8x32xf32> to vector<8x32xf32>
    %137 = vector.shape_cast %133 : vector<8x32xf32> to vector<1x8x32xf32>
    tpu.vector_store %arg6[%134, %c0_31, %c0_32], %137 {strides = array<i32>} : memref<4x8x32xf32, #tpu.memory_space<vmem>>, vector<1x8x32xf32>,
    %c4_i32 = arith.constant 4 : i32
    %c0_33 = arith.constant 0 : index
    %c0_34 = arith.constant 0 : index
    %c0_35 = arith.constant 0 : index
    %138 = vector.load %arg6[%c0_33, %c0_34, %c0_35] : memref<4x8x32xf32, #tpu.memory_space<vmem>>, vector<4x8x32xf32>
    %c0_36 = arith.constant 0 : index
    %c0_37 = arith.constant 0 : index
    %c0_38 = arith.constant 0 : index
    %139 = vector.load %arg3[%c0_36, %c0_37, %c0_38] : memref<1x1x32xf32, #tpu.memory_space<vmem>>, vector<1x1x32xf32>
    %140 = vector.broadcast %139 : vector<1x1x32xf32> to vector<4x8x32xf32>
    %141 = arith.mulf %138, %140 : vector<4x8x32xf32>
    %cst_39 = arith.constant dense<0.000000e+00> : vector<4x8xf32>
    %142 = vector.multi_reduction <add>, %141, %cst_39 [2] : vector<4x8x32xf32> to vector<4x8xf32>
    %c0_40 = arith.constant 0 : index
    %c0_41 = arith.constant 0 : index
    %143 = vector.load %arg4[%c0_40, %c0_41] : memref<1x1xf32, #tpu.memory_space<vmem>>, vector<1x1xf32>
    %144 = vector.broadcast %143 : vector<1x1xf32> to vector<4x8xf32>
    %145 = arith.addf %142, %144 : vector<4x8xf32>
    %146 = math.tanh %145 : vector<4x8xf32>
    %c0_42 = arith.constant 0 : index
    %c0_43 = arith.constant 0 : index
    %147 = vector.load %arg5[%c0_42, %c0_43] : memref<4x8xf32, #tpu.memory_space<vmem>>, vector<4x8xf32>
    tpu.vector_store %arg5[%c0_42, %c0_43], %146 {strides = array<i32>} : memref<4x8xf32, #tpu.memory_space<vmem>>, vector<4x8xf32>,
    return
  }
  func.func @transform_0(%arg0: i32) -> (i32, i32, i32) {
    %c0_i32 = arith.constant 0 : i32
    %c0_i32_0 = arith.constant 0 : i32
    %c0_i32_1 = arith.constant 0 : i32
    %c0_i32_2 = arith.constant 0 : i32
    return %c0_i32, %c0_i32_0, %c0_i32_1 : i32, i32, i32
  }
  func.func @transform_1(%arg0: i32) -> (i32, i32) {
    %c0_i32 = arith.constant 0 : i32
    %c0_i32_0 = arith.constant 0 : i32
    %c0_i32_1 = arith.constant 0 : i32
    return %c0_i32, %c0_i32_0 : i32, i32
  }
  func.func @transform_2(%arg0: i32) -> (i32, i32, i32) {
    %c0_i32 = arith.constant 0 : i32
    %c0_i32_0 = arith.constant 0 : i32
    %c0_i32_1 = arith.constant 0 : i32
    %c0_i32_2 = arith.constant 0 : i32
    return %c0_i32, %c0_i32_0, %c0_i32_1 : i32, i32, i32
  }
  func.func @transform_3(%arg0: i32) -> (i32, i32) {
    %c0_i32 = arith.constant 0 : i32
    %c0_i32_0 = arith.constant 0 : i32
    %c0_i32_1 = arith.constant 0 : i32
    return %c0_i32, %c0_i32_0 : i32, i32
  }
  func.func @transform_4(%arg0: i32) -> (i32, i32) {
    %c0_i32 = arith.constant 0 : i32
    %c0_i32_0 = arith.constant 0 : i32
    %c0_i32_1 = arith.constant 0 : i32
    return %c0_i32, %c0_i32_0 : i32, i32
  }
}

</mosaic_0001>

<llo_original>
// kernel: user_temp_forward.1
$region0: #{user_temp_forward.1}
  #allocation0 [shape = 'u32[]', space=smem, size = 0x4, offset = 0x4, fixed_abs, tag = 'smem constant byte address 0x4 - core index']
  #allocation1 [shape = 'u32[72,128]{1,0:T(1,128)}', space=vmem, size = 0x9000, scoped, tag = 'internal scratch']
  #allocation2 [shape = 'f32[4,8,32]{2,1,0:T(8,128)}', space=vmem, size = 0x4000, scoped, tag = 'scratch operand']
  #allocation3 [shape = 'f32[1,1]{1,0:T(1,128)S(1)}', space=vmem, size = 0x200, scoped, tag = 'scoped memory for user_temp_forward.1']
  %s0 = inlined_call_operand.vmem [shape: f32[4,8,128], index: 0, kind: input, shape index: {}]
  %s1 = inlined_call_operand.vmem [shape: f32[32,128], index: 1, kind: input, shape index: {}]
  %s2 = inlined_call_operand.vmem [shape: f32[1,1,32], index: 2, kind: input, shape index: {}]
  %s3 = inlined_call_operand.<no memory space> [shape: f32[1,1], index: 3, kind: input, shape index: {}]
  %s4 = inlined_call_operand.hbm [shape: f32[4,8], index: 4, kind: output, shape index: {}]
  %s5 = sld [smem:[#allocation0]]
  $region26: #{user_temp_forward.1} parent=0
    _
  %s7 = ssub.s32 1, %s5
  %s8 = scalar_select 0, %s7, %s5
  %v9 = vstv %s3
  %10 = vst [vmem:[#allocation3] sm:$0x1] %v9
  $region1: #{user_temp_forward.1} parent=0
    #allocation4 [shape = 'u8[2048]{0}', space=vmem, size = 0x800, scoped, tag = 'output window, operand 0, single buffered']
    #allocation5 [shape = 's32[1]{0}', space=sflag, size = 0x4, scoped, tag = 'scoped memory for user_temp_forward.1']
    %11 = vsyncpa [#allocation5], 0
    // Predicated region
    $region2: #{user_temp_forward.1} parent=1 // pred_check
      _
    $region3: #{user_temp_forward.1} parent=1 // pred_check_branch
      %13 = sbr.rel (0) target = $region5
    $region4: #{user_temp_forward.1} parent=1 // pred_region
      _
    $region5: #{user_temp_forward.1} parent=1 // pred_fallthru
      _
    // Predicated region
    $region6: #{user_temp_forward.1} parent=1 // pred_check
      _
    $region7: #{user_temp_forward.1} parent=1 // pred_check_branch
      %15 = sbr.rel (0) target = $region9
    $region8: #{user_temp_forward.1} parent=1 // pred_region
      _
    $region9: #{user_temp_forward.1} parent=1 // pred_fallthru
      _
    // Predicated region
    $region10: #{user_temp_forward.1} parent=1 // pred_check
      _
    $region11: #{user_temp_forward.1} parent=1 // pred_check_branch
      %17 = sbr.rel (0) target = $region13
    $region12: #{user_temp_forward.1} parent=1 // pred_region
      _
    $region13: #{user_temp_forward.1} parent=1 // pred_fallthru
      _
    // Predicated region
    $region14: #{user_temp_forward.1} parent=1 // pred_check
      _
    $region15: #{user_temp_forward.1} parent=1 // pred_check_branch
      %19 = sbr.rel (0) target = $region17
    $region16: #{user_temp_forward.1} parent=1 // pred_region
      _
    $region17: #{user_temp_forward.1} parent=1 // pred_fallthru
      _
    %v20 = vld [vmem:[%s1] sm:$0xff]
    %v21 = vld [vmem:[%s1 + $0x8] sm:$0xff]
    %v22 = vld [vmem:[%s1 + $0x10] sm:$0xff]
    %v23 = vld [vmem:[%s1 + $0x18] sm:$0xff]
    %v24 = vld [vmem:[%s0] sm:$0xff]
    %vm25 = vcmask 261120
    %v27 = vsel %vm25, 0.0, 0
    %29 = vmatpush.msra.mxu0 0.0
    %30 = vmatpush.msra.mxu0 0.0
    %31 = vmatpush.msra.mxu0 0.0
    %32 = vmatpush.msra.mxu0 0.0
    %33 = vmatpush.msra.mxu0 0.0
    %34 = vmatpush.msra.mxu0 0.0
    %35 = vmatpush.msra.mxu0 0.0
    %36 = vmatpush.msra.mxu0 0.0
    %37 = vmatpush.msra.mxu0 0.0
    %38 = vmatpush.msra.mxu0 0.0
    %39 = vmatpush.msra.mxu0 0.0
    %40 = vmatpush.msra.mxu0 0.0
    %41 = vmatpush.msra.mxu0 %v23
    %42 = vmatpush.msra.mxu0 %v22
    %43 = vmatpush.msra.mxu0 %v21
    %44 = vmatpush.msra.mxu0 %v20
    %45 = vmatmul.f32.gmra.mxu0 %v27
    %v46 = vpop.f32.mrf.mxu0
    %v47 = vadd.f32 0.0, %v46
    %48 = vdwg.mxu0
    %v49 = vadd.f32 %v24, %v47
    %v50 = vxor.u32 %v49, 2147483648
    %v51 = vmul.f32 %v50, 1.442695
    %v52 = vpow.pop %v51
    %v53 = vadd.f32 %v52, 1.0
    %v54 = vrcp.pop %v53
    %v55 = vmul.f32 %v53, %v54
    %v56 = vsub.f32 1.0, %v55
    %v57 = vmul.f32 %v54, %v56
    %v58 = vadd.f32 %v54, %v57
    %vm59 = vweird.f32 %v53
    %vm60 = vweird.f32 %v54
    %vm61 = vmor %vm59, %vm60
    %v62 = vsel %vm61, %v54, %v58
    %v63 = vand.u32 2147483647, %v53
    %vm64 = vcmp.eq.f32.partialorder %v63, 8.507059e+37
    %v65 = vand.u32 %v53, 2147483648
    %v66 = vor.u32 1.1754944e-38, %v65
    %v67 = vsel %vm64, %v66, %v62
    %v68 = vmul.f32 1.0, %v67
    %v69 = vtanh.pop %v49
    %v70 = vmul.f32 %v68, 0.0
    %72 = vrot.lane.b32.xlu0 %v69, 64
    %v73 = vpop.permute.xlu0 %72
    %v75 = vmul.f32 %v68, %v73
    %77 = vrot.lane.b32.xlu0 %v75, 32
    %v78 = vpop.permute.xlu0 %77
    %v80 = vadd.f32 %v70, %v78
    %v81 = vtanh.pop %v80
    %83 = vrot.lane.b32.xlu0 %v81, 64
    %v84 = vpop.permute.xlu0 %83
    %v86 = vmul.f32 %v68, %v84
    %88 = vrot.lane.b32.xlu0 %v86, 32
    %v89 = vpop.permute.xlu0 %88
    %91 = vst.msk [vmem:[#allocation2] sm:$0xff] %vm25, %v89
    %s92 = scalar_lea.vmem %s0, 8
    %v93 = vld [vmem:[%s92] sm:$0xff]
    %v94 = vsel %vm25, %v89, 0
    %96 = vmatpush.msra.mxu0 0.0
    %97 = vmatpush.msra.mxu0 0.0
    %98 = vmatpush.msra.mxu0 0.0
    %99 = vmatpush.msra.mxu0 0.0
    %100 = vmatpush.msra.mxu0 0.0
    %101 = vmatpush.msra.mxu0 0.0
    %102 = vmatpush.msra.mxu0 0.0
    %103 = vmatpush.msra.mxu0 0.0
    %104 = vmatpush.msra.mxu0 0.0
    %105 = vmatpush.msra.mxu0 0.0
    %106 = vmatpush.msra.mxu0 0.0
    %107 = vmatpush.msra.mxu0 0.0
    %108 = vmatpush.msra.mxu0 %v23
    %109 = vmatpush.msra.mxu0 %v22
    %110 = vmatpush.msra.mxu0 %v21
    %111 = vmatpush.msra.mxu0 %v20
    %112 = vmatmul.f32.gmra.mxu0 %v94
    %v113 = vpop.f32.mrf.mxu0
    %v114 = vadd.f32 0.0, %v113
    %115 = vdwg.mxu0
    %v116 = vadd.f32 %v93, %v114
    %v117 = vxor.u32 %v116, 2147483648
    %v118 = vmul.f32 %v117, 1.442695
    %v119 = vpow.pop %v118
    %v120 = vadd.f32 %v119, 1.0
    %v121 = vrcp.pop %v120
    %v122 = vmul.f32 %v120, %v121
    %v123 = vsub.f32 1.0, %v122
    %v124 = vmul.f32 %v121, %v123
    %v125 = vadd.f32 %v121, %v124
    %vm126 = vweird.f32 %v120
    %vm127 = vweird.f32 %v121
    %vm128 = vmor %vm126, %vm127
    %v129 = vsel %vm128, %v121, %v125
    %v130 = vand.u32 2147483647, %v120
    %vm131 = vcmp.eq.f32.partialorder %v130, 8.507059e+37
    %v132 = vand.u32 %v120, 2147483648
    %v133 = vor.u32 1.1754944e-38, %v132
    %v134 = vsel %vm131, %v133, %v129
    %v135 = vmul.f32 1.0, %v134
    %v136 = vtanh.pop %v116
    %v137 = vmul.f32 %v135, %v80
    %139 = vrot.lane.b32.xlu0 %v136, 64
    %v140 = vpop.permute.xlu0 %139
    %v142 = vmul.f32 %v135, %v140
    %144 = vrot.lane.b32.xlu0 %v142, 32
    %v145 = vpop.permute.xlu0 %144
    %v147 = vadd.f32 %v137, %v145
    %v148 = vtanh.pop %v147
    %150 = vrot.lane.b32.xlu0 %v148, 64
    %v151 = vpop.permute.xlu0 %150
    %v153 = vmul.f32 %v135, %v151
    %155 = vrot.lane.b32.xlu0 %v153, 32
    %v156 = vpop.permute.xlu0 %155
    %s158 = scalar_lea.vmem [#allocation2], 8
    %159 = vst.msk [vmem:[%s158] sm:$0xff] %vm25, %v156
    %s160 = scalar_lea.vmem %s0, 16
    %v161 = vld [vmem:[%s160] sm:$0xff]
    %v162 = vsel %vm25, %v156, 0
    %164 = vmatpush.msra.mxu0 0.0
    %165 = vmatpush.msra.mxu0 0.0
    %166 = vmatpush.msra.mxu0 0.0
    %167 = vmatpush.msra.mxu0 0.0
    %168 = vmatpush.msra.mxu0 0.0
    %169 = vmatpush.msra.mxu0 0.0
    %170 = vmatpush.msra.mxu0 0.0
    %171 = vmatpush.msra.mxu0 0.0
    %172 = vmatpush.msra.mxu0 0.0
    %173 = vmatpush.msra.mxu0 0.0
    %174 = vmatpush.msra.mxu0 0.0
    %175 = vmatpush.msra.mxu0 0.0
    %176 = vmatpush.msra.mxu0 %v23
    %177 = vmatpush.msra.mxu0 %v22
    %178 = vmatpush.msra.mxu0 %v21
    %179 = vmatpush.msra.mxu0 %v20
    %180 = vmatmul.f32.gmra.mxu0 %v162
    %v181 = vpop.f32.mrf.mxu0
    %v182 = vadd.f32 0.0, %v181
    %183 = vdwg.mxu0
    %v184 = vadd.f32 %v161, %v182
    %v185 = vxor.u32 %v184, 2147483648
    %v186 = vmul.f32 %v185, 1.442695
    %v187 = vpow.pop %v186
    %v188 = vadd.f32 %v187, 1.0
    %v189 = vrcp.pop %v188
    %v190 = vmul.f32 %v188, %v189
    %v191 = vsub.f32 1.0, %v190
    %v192 = vmul.f32 %v189, %v191
    %v193 = vadd.f32 %v189, %v192
    %vm194 = vweird.f32 %v188
    %vm195 = vweird.f32 %v189
    %vm196 = vmor %vm194, %vm195
    %v197 = vsel %vm196, %v189, %v193
    %v198 = vand.u32 2147483647, %v188
    %vm199 = vcmp.eq.f32.partialorder %v198, 8.507059e+37
    %v200 = vand.u32 %v188, 2147483648
    %v201 = vor.u32 1.1754944e-38, %v200
    %v202 = vsel %vm199, %v201, %v197
    %v203 = vmul.f32 1.0, %v202
    %v204 = vtanh.pop %v184
    %v205 = vmul.f32 %v203, %v147
    %207 = vrot.lane.b32.xlu0 %v204, 64
    %v208 = vpop.permute.xlu0 %207
    %v210 = vmul.f32 %v203, %v208
    %212 = vrot.lane.b32.xlu0 %v210, 32
    %v213 = vpop.permute.xlu0 %212
    %v215 = vadd.f32 %v205, %v213
    %v216 = vtanh.pop %v215
    %218 = vrot.lane.b32.xlu0 %v216, 64
    %v219 = vpop.permute.xlu0 %218
    %v221 = vmul.f32 %v203, %v219
    %223 = vrot.lane.b32.xlu0 %v221, 32
    %v224 = vpop.permute.xlu0 %223
    %s226 = scalar_lea.vmem [#allocation2], 16
    %227 = vst.msk [vmem:[%s226] sm:$0xff] %vm25, %v224
    %s228 = scalar_lea.vmem %s0, 24
    %v229 = vld [vmem:[%s228] sm:$0xff]
    %v230 = vsel %vm25, %v224, 0
    %232 = vmatpush.msra.mxu0 0.0
    %233 = vmatpush.msra.mxu0 0.0
    %234 = vmatpush.msra.mxu0 0.0
    %235 = vmatpush.msra.mxu0 0.0
    %236 = vmatpush.msra.mxu0 0.0
    %237 = vmatpush.msra.mxu0 0.0
    %238 = vmatpush.msra.mxu0 0.0
    %239 = vmatpush.msra.mxu0 0.0
    %240 = vmatpush.msra.mxu0 0.0
    %241 = vmatpush.msra.mxu0 0.0
    %242 = vmatpush.msra.mxu0 0.0
    %243 = vmatpush.msra.mxu0 0.0
    %244 = vmatpush.msra.mxu0 %v23
    %245 = vmatpush.msra.mxu0 %v22
    %246 = vmatpush.msra.mxu0 %v21
    %247 = vmatpush.msra.mxu0 %v20
    %248 = vmatmul.f32.gmra.mxu0 %v230
    %v249 = vpop.f32.mrf.mxu0
    %v250 = vadd.f32 0.0, %v249
    %251 = vdwg.mxu0
    %v252 = vadd.f32 %v229, %v250
    %v253 = vxor.u32 %v252, 2147483648
    %v254 = vmul.f32 %v253, 1.442695
    %v255 = vpow.pop %v254
    %v256 = vadd.f32 %v255, 1.0
    %v257 = vrcp.pop %v256
    %v258 = vmul.f32 %v256, %v257
    %v259 = vsub.f32 1.0, %v258
    %v260 = vmul.f32 %v257, %v259
    %v261 = vadd.f32 %v257, %v260
    %vm262 = vweird.f32 %v256
    %vm263 = vweird.f32 %v257
    %vm264 = vmor %vm262, %vm263
    %v265 = vsel %vm264, %v257, %v261
    %v266 = vand.u32 2147483647, %v256
    %vm267 = vcmp.eq.f32.partialorder %v266, 8.507059e+37
    %v268 = vand.u32 %v256, 2147483648
    %v269 = vor.u32 1.1754944e-38, %v268
    %v270 = vsel %vm267, %v269, %v265
    %v271 = vmul.f32 1.0, %v270
    %v272 = vtanh.pop %v252
    %v273 = vmul.f32 %v271, %v215
    %275 = vrot.lane.b32.xlu0 %v272, 64
    %v276 = vpop.permute.xlu0 %275
    %v278 = vmul.f32 %v271, %v276
    %280 = vrot.lane.b32.xlu0 %v278, 32
    %v281 = vpop.permute.xlu0 %280
    %v283 = vadd.f32 %v273, %v281
    %v284 = vtanh.pop %v283
    %286 = vrot.lane.b32.xlu0 %v284, 64
    %v287 = vpop.permute.xlu0 %286
    %v289 = vmul.f32 %v271, %v287
    %291 = vrot.lane.b32.xlu0 %v289, 32
    %v292 = vpop.permute.xlu0 %291
    %s294 = scalar_lea.vmem [#allocation2], 24
    %295 = vst.msk [vmem:[%s294] sm:$0xff] %vm25, %v292
    %v296 = vld [vmem:[#allocation2] sm:$0xff]
    %v297 = vld [vmem:[#allocation2 + $0x8] sm:$0xff]
    %v298 = vld [vmem:[#allocation2 + $0x10] sm:$0xff]
    %v299 = vld [vmem:[#allocation2 + $0x18] sm:$0xff]
    %v300 = vld [vmem:[%s2] sm:$0x1]
    %v302 = vperm.slane %v300, 0
    %v304 = vmul.f32 %v296, %v302
    %v305 = vmul.f32 %v297, %v302
    %v306 = vmul.f32 %v298, %v302
    %v307 = vmul.f32 %v299, %v302
    %v308 = vsel %vm25, %v304, 0.0
    %309 = vadd.xlane.f32.xlu0 %v308
    %v310 = vpop.xlane.xlu0 %309
    %v311 = vsel %vm25, %v305, 0.0
    %312 = vadd.xlane.f32.xlu0 %v311
    %v313 = vpop.xlane.xlu0 %312
    %v314 = vsel %vm25, %v306, 0.0
    %315 = vadd.xlane.f32.xlu0 %v314
    %v316 = vpop.xlane.xlu0 %315
    %v317 = vsel %vm25, %v307, 0.0
    %318 = vadd.xlane.f32.xlu0 %v317
    %v319 = vpop.xlane.xlu0 %318
    %v320 = vld [vmem:[#allocation3] sm:$0x1]
    %v322 = vperm.slane %v320, 0
    %323 = vset.pattern.permute.xlu0 0
    %324 = vperm.xlu0 %323, %v322
    %v325 = vpop.permute.xlu0 %324
    %v327 = vadd.f32 %v310, %v325
    %v328 = vadd.f32 %v313, %v325
    %v329 = vadd.f32 %v316, %v325
    %v330 = vadd.f32 %v319, %v325
    %v331 = vtanh.pop %v327
    %v332 = vtanh.pop %v328
    %v333 = vtanh.pop %v329
    %v334 = vtanh.pop %v330
    %v339 = vlaneseq
    %v340 = vand.u32 %v339, 127
    %v341 = vperm.slane %v331, %v340
    %v342 = vperm.slane %v332, %v340
    %v343 = vperm.slane %v333, %v340
    %v344 = vperm.slane %v334, %v340
    %vm345 = vcmask 1041409
    %v346 = vsel %vm345, %v342, %v341
    %vm347 = vcmask 1042434
    %v348 = vsel %vm347, %v343, %v346
    %vm349 = vcmask 1043459
    %v350 = vsel %vm349, %v344, %v348
    %vm352 = vcmask 60416
    %353 = vst.msk [vmem:[#allocation4] sm:$0xf] %vm352, %v350
    // Predicated region
    $region18: #{user_temp_forward.1} parent=1 // pred_check
      _
    $region19: #{user_temp_forward.1} parent=1 // pred_check_branch
      %355 = sbr.rel (0) target = $region21
    $region20: #{user_temp_forward.1} parent=1 // pred_region
      %357 = vsyncadd [#allocation5], 0
      %s359 = sshll.u32 [#allocation4], 4
      %s360 = int_to_ptr.vmem [resolvable:$true] %s359
      %s361 = sshll.u32 %s4, 4
      %s362 = int_to_ptr.hbm [resolvable:$true] %s361
      %364 = dma.vmem_to_hbm [thread:$0]  %s360, 64, %s362, [#allocation5]
    $region21: #{user_temp_forward.1} parent=1 // pred_fallthru
      _
    // Predicated region
    $region22: #{user_temp_forward.1} parent=1 // pred_check
      _
    $region23: #{user_temp_forward.1} parent=1 // pred_check_branch
      %366 = sbr.rel (0) target = $region25
    $region24: #{user_temp_forward.1} parent=1 // pred_region
      %368 = dma.done [#allocation5], 64
    $region25: #{user_temp_forward.1} parent=1 // pred_fallthru
      _
    %369 = vsyncpa [#allocation5], 1

</llo_original>
